<compile_context>
chip_gen: v7x
topology: tpu7x:2x2x1
jax: 0.10.0
libtpu: 0.0.40
codegen_flags: <defaults>
</compile_context>

<pallas_src>
import functools

import jax
import jax.numpy as jnp
from jax.experimental import pallas as pl
from jax.experimental.pallas import tpu as pltpu


def _spatial_attention_kernel(w_ref, b_ref, x_ref, o_ref, *, C, H, W):
    """SpatialAttention on a (block_n, C*H*W) lane-dense slab.

    w_ref: (18,) f32 SMEM   -- conv weight (1,2,3,3) flattened [ci*9 + kh*3 + kw]
    b_ref: (1,)  f32 SMEM   -- conv bias
    x_ref: (Nb, C*H*W) VMEM -- each channel is a contiguous lane slab of HW
    o_ref: (Nb, C*H*W) VMEM
    """
    HW = H * W
    Nb = x_ref.shape[0]

    # ---- Channel max / mean over C contiguous lane-aligned slabs (plain ----
    # ---- vmax / vadd across slabs; no cross-sublane reduction, no pad). ----
    s0 = x_ref[:, 0:HW].astype(jnp.float32)
    c_max = s0
    c_sum = s0
    for c in range(1, C):
        s = x_ref[:, c * HW:(c + 1) * HW].astype(jnp.float32)
        c_max = jnp.maximum(c_max, s)
        c_sum = c_sum + s
    c_avg = c_sum * (1.0 / C)

    # ---- 3x3 conv (2 -> 1, padding=1) as 9 shifted MACs kept in vregs. -----
    # Invariant guard: every position that the roll wraps around the flattened
    # spatial axis is also zeroed by the border mask below; this holds because
    # |shift| <= W + 1 and the dh/dw masks cover exactly the first/last row
    # and column.  Do NOT tile HW without adding a halo.
    pos = jax.lax.broadcasted_iota(jnp.int32, (1, HW), 1)           # flat index
    col = (pos & (W - 1)) if (W & (W - 1)) == 0 else (pos % W)      # w coordinate

    acc = jnp.full((Nb, HW), b_ref[0], dtype=jnp.float32)
    for kh in range(3):
        dh = kh - 1
        for kw in range(3):
            dw = kw - 1
            # Both input channels share the same spatial shift for this tap.
            tap = (w_ref[kh * 3 + kw] * c_max
                   + w_ref[9 + kh * 3 + kw] * c_avg)                # (Nb, HW)
            shift = dh * W + dw
            if shift != 0:
                # want tap'[p] = tap[p + shift]; roll(x, k)[p] = x[p - k]
                tap = pltpu.roll(tap, (-shift) % HW, axis=1)        # XLU rotate
            valid = None
            if dh == -1:
                valid = pos >= W                                    # h - 1 >= 0
            elif dh == 1:
                valid = pos < (H - 1) * W                           # h + 1 <  H
            if dw == -1:
                vw = col >= 1                                       # w - 1 >= 0
                valid = vw if valid is None else valid & vw
            elif dw == 1:
                vw = col <= W - 2                                   # w + 1 <  W
                valid = vw if valid is None else valid & vw
            if valid is not None:
                tap = jnp.where(valid, tap, 0.0)
            acc = acc + tap

    # sigmoid: exp lands on the EUP; reciprocal kept exact for the strict
    # 1e-5 reference tolerance (approx=True would be a free EUP win at ~1e-3).
    attn = pl.reciprocal(1.0 + jnp.exp(-acc), approx=False)         # (Nb, HW)

    # ---- Broadcast-multiply per channel slab: lane-dense unmasked stores. --
    for c in range(C):
        xs = x_ref[:, c * HW:(c + 1) * HW]                          # native dtype
        o_ref[:, c * HW:(c + 1) * HW] = (
            xs * attn.astype(xs.dtype)).astype(o_ref.dtype)


def spatial_attention(x, conv_w, conv_b, *, block_n=None):
    """x: (N, C, H, W); conv_w: (1, 2, 3, 3); conv_b: (1,)."""
    N, C, H, W = x.shape
    HW = H * W
    x2d = x.reshape(N, C * HW)                        # free contiguous reshape
    w_flat = conv_w.reshape(-1).astype(jnp.float32)   # (18,)
    b = conv_b.reshape(-1).astype(jnp.float32)        # (1,)

    itemsize = jnp.dtype(x.dtype).itemsize
    per_batch = C * HW * itemsize
    sublane = 32 // itemsize                          # 8 f32 / 16 bf16 / 32 i8

    if block_n is None:
        # ~3 MiB input tile per step keeps the ~0.35us/step overhead at a few
        # percent even at v7x HBM speed (3.2 TB/s).
        target = 3 << 20
        block_n = max(1, min(N, target // max(per_batch, 1)))
        # Keep >= 8 grid steps when N allows it, so both v7x TensorCores get
        # several pipelined steps (prologue/epilogue hidden).
        min_steps = 8
        if N >= min_steps:
            block_n = min(block_n, pl.cdiv(N, min_steps))
        # Sublane-align block_n (it is the second-to-last dim of the block).
        if block_n >= sublane:
            block_n -= block_n % sublane
    block_n = max(1, min(block_n, N))

    # VMEM budget: in + out double-buffered blocks plus the f32 pooled-map /
    # accumulator / mask temporaries (~8 x block_n x HW x 4 bytes).
    vmem_budget = 32 << 20

    def _est(bn):
        return 4 * bn * per_batch + 8 * bn * HW * 4

    while block_n > 1 and _est(block_n) > (vmem_budget * 3) // 4:
        block_n = max(1, block_n // 2)
    # TODO(synk): if a single batch element still blows the budget (very large
    # C*H*W), add a spatial grid axis over row blocks with a halo.

    # Ragged last block is fine: padded rows are per-(n, hw) independent and
    # their outputs are discarded (no cross-batch mixing anywhere).
    grid_n = pl.cdiv(N, block_n)

    kernel = functools.partial(_spatial_attention_kernel, C=C, H=H, W=W)
    cost = pl.CostEstimate(
        flops=int(N * HW * (3 * C + 5 * 9 + 4)),
        transcendentals=int(N * HW),
        bytes_accessed=int(2 * N * C * HW * itemsize),
    )

    out = pl.pallas_call(
        kernel,
        out_shape=jax.ShapeDtypeStruct((N, C * HW), x.dtype),
        grid_spec=pltpu.PrefetchScalarGridSpec(
            num_scalar_prefetch=0,
            grid=(grid_n,),
            in_specs=[
                pl.BlockSpec(memory_space=pltpu.MemorySpace.SMEM),   # conv weight
                pl.BlockSpec(memory_space=pltpu.MemorySpace.SMEM),   # conv bias
                pl.BlockSpec((block_n, C * HW), lambda n: (n, 0)),   # x slab
            ],
            out_specs=pl.BlockSpec((block_n, C * HW), lambda n: (n, 0)),
        ),
        compiler_params=pltpu.CompilerParams(
            dimension_semantics=("parallel",),
            vmem_limit_bytes=vmem_budget,
        ),
        cost_estimate=cost,
    )(w_flat, b, x2d)
    return out.reshape(N, C, H, W)


def _reference(x, conv_w, conv_b):
    c_max = jnp.max(x, axis=1, keepdims=True)
    c_avg = jnp.mean(x, axis=1, keepdims=True)
    c = jnp.concatenate([c_max, c_avg], axis=1)
    conv = jax.lax.conv_general_dilated(
        c, conv_w, window_strides=(1, 1), padding="SAME",
        dimension_numbers=("NCHW", "OIHW", "NCHW"),
    ) + conv_b.reshape(1, 1, 1, 1)
    return jax.nn.sigmoid(conv) * x


if __name__ == "__main__":
    key = jax.random.PRNGKey(0)
    kx, kw, kb = jax.random.split(key, 3)

    N, C, H, W = 2, 4, 16, 16
    x = jax.random.normal(kx, (N, C, H, W), dtype=jnp.float32)

    # Deterministic conv parameters (nn.Conv2d(2, 1, 3, padding=1) shapes).
    fan_in = 2 * 3 * 3
    bound = 1.0 / (fan_in ** 0.5)
    conv_w = jax.random.uniform(kw, (1, 2, 3, 3), jnp.float32, -bound, bound)
    conv_b = jax.random.uniform(kb, (1,), jnp.float32, -bound, bound)

    out = jax.block_until_ready(spatial_attention(x, conv_w, conv_b))
    ref = _reference(x, conv_w, conv_b)

    assert out.shape == (N, C, H, W)
    assert jnp.allclose(out, ref, atol=1e-5, rtol=1e-5), float(
        jnp.max(jnp.abs(out - ref)))
    print("KERNEL_OK")
</pallas_src>

<mosaic_0001>
module attributes {stable_mosaic.version = 11 : i64} {
  func.func @_spatial_attention_kernel(%arg0: i32, %arg1: memref<18xf32, #tpu.memory_space<smem>>, %arg2: memref<1xf32, #tpu.memory_space<smem>>, %arg3: memref<2x1024xf32, #tpu.memory_space<vmem>>, %arg4: memref<2x1024xf32, #tpu.memory_space<vmem>>) attributes {dimension_semantics = [#tpu.dimension_semantics<parallel>], iteration_bounds = array<i64: 1>, scalar_prefetch = 0 : i64, scratch_operands = 0 : i64, tpu.core_type = #tpu.core_type<tc>, window_params = [{transform_indices = @transform_0, window_bounds = array<i64: 18>}, {transform_indices = @transform_1, window_bounds = array<i64: 1>}, {transform_indices = @transform_2, window_bounds = array<i64: 2, 1024>}, {transform_indices = @transform_3, window_bounds = array<i64: 2, 1024>}]} {
    %c0 = arith.constant 0 : index
    %c0_0 = arith.constant 0 : index
    %0 = vector.load %arg3[%c0, %c0_0] : memref<2x1024xf32, #tpu.memory_space<vmem>>, vector<2x256xf32>
    %c0_1 = arith.constant 0 : index
    %c256 = arith.constant 256 : index
    %1 = vector.load %arg3[%c0_1, %c256] : memref<2x1024xf32, #tpu.memory_space<vmem>>, vector<2x256xf32>
    %2 = arith.maximumf %0, %1 : vector<2x256xf32>
    %3 = arith.addf %0, %1 : vector<2x256xf32>
    %c0_2 = arith.constant 0 : index
    %c512 = arith.constant 512 : index
    %4 = vector.load %arg3[%c0_2, %c512] : memref<2x1024xf32, #tpu.memory_space<vmem>>, vector<2x256xf32>
    %5 = arith.maximumf %2, %4 : vector<2x256xf32>
    %6 = arith.addf %3, %4 : vector<2x256xf32>
    %c0_3 = arith.constant 0 : index
    %c768 = arith.constant 768 : index
    %7 = vector.load %arg3[%c0_3, %c768] : memref<2x1024xf32, #tpu.memory_space<vmem>>, vector<2x256xf32>
    %8 = arith.maximumf %5, %7 : vector<2x256xf32>
    %9 = arith.addf %6, %7 : vector<2x256xf32>
    %cst = arith.constant 2.500000e-01 : f32
    %10 = vector.broadcast %cst : f32 to vector<2x256xf32>
    %11 = arith.mulf %9, %10 : vector<2x256xf32>
    %12 = tpu.iota {dimensions = array<i32: 1>} : vector<1x256xi32>
    %c15_i32 = arith.constant 15 : i32
    %13 = vector.broadcast %c15_i32 : i32 to vector<1x256xi32>
    %14 = arith.andi %12, %13 : vector<1x256xi32>
    %c0_4 = arith.constant 0 : index
    %15 = memref.load %arg2[%c0_4] : memref<1xf32, #tpu.memory_space<smem>>
    %16 = vector.broadcast %15 : f32 to vector<2x256xf32>
    %c0_5 = arith.constant 0 : index
    %17 = memref.load %arg1[%c0_5] : memref<18xf32, #tpu.memory_space<smem>>
    %18 = vector.broadcast %17 : f32 to vector<2x256xf32>
    %19 = arith.mulf %18, %8 : vector<2x256xf32>
    %c9 = arith.constant 9 : index
    %20 = memref.load %arg1[%c9] : memref<18xf32, #tpu.memory_space<smem>>
    %21 = vector.broadcast %20 : f32 to vector<2x256xf32>
    %22 = arith.mulf %21, %11 : vector<2x256xf32>
    %23 = arith.addf %19, %22 : vector<2x256xf32>
    %c17_i32 = arith.constant 17 : i32
    %24 = tpu.dynamic_rotate %23 by %c17_i32 dim 1 : vector<2x256xf32>, i32 -> vector<2x256xf32>
    %c16_i32 = arith.constant 16 : i32
    %25 = vector.broadcast %c16_i32 : i32 to vector<1x256xi32>
    %26 = arith.cmpi sge, %12, %25 : vector<1x256xi32>
    %c1_i32 = arith.constant 1 : i32
    %27 = vector.broadcast %c1_i32 : i32 to vector<1x256xi32>
    %28 = arith.cmpi sge, %14, %27 : vector<1x256xi32>
    %29 = arith.andi %26, %28 : vector<1x256xi1>
    %cst_6 = arith.constant 0.000000e+00 : f32
    %30 = vector.shape_cast %29 : vector<1x256xi1> to vector<1x256xi1>
    %31 = vector.broadcast %30 : vector<1x256xi1> to vector<2x256xi1>
    %32 = vector.broadcast %cst_6 : f32 to vector<2x256xf32>
    %33 = arith.select %31, %24, %32 : vector<2x256xi1>, vector<2x256xf32>
    %34 = arith.addf %16, %33 : vector<2x256xf32>
    %c1 = arith.constant 1 : index
    %35 = memref.load %arg1[%c1] : memref<18xf32, #tpu.memory_space<smem>>
    %36 = vector.broadcast %35 : f32 to vector<2x256xf32>
    %37 = arith.mulf %36, %8 : vector<2x256xf32>
    %c10 = arith.constant 10 : index
    %38 = memref.load %arg1[%c10] : memref<18xf32, #tpu.memory_space<smem>>
    %39 = vector.broadcast %38 : f32 to vector<2x256xf32>
    %40 = arith.mulf %39, %11 : vector<2x256xf32>
    %41 = arith.addf %37, %40 : vector<2x256xf32>
    %c16_i32_7 = arith.constant 16 : i32
    %42 = tpu.dynamic_rotate %41 by %c16_i32_7 dim 1 : vector<2x256xf32>, i32 -> vector<2x256xf32>
    %c16_i32_8 = arith.constant 16 : i32
    %43 = vector.broadcast %c16_i32_8 : i32 to vector<1x256xi32>
    %44 = arith.cmpi sge, %12, %43 : vector<1x256xi32>
    %cst_9 = arith.constant 0.000000e+00 : f32
    %45 = vector.shape_cast %44 : vector<1x256xi1> to vector<1x256xi1>
    %46 = vector.broadcast %45 : vector<1x256xi1> to vector<2x256xi1>
    %47 = vector.broadcast %cst_9 : f32 to vector<2x256xf32>
    %48 = arith.select %46, %42, %47 : vector<2x256xi1>, vector<2x256xf32>
    %49 = arith.addf %34, %48 : vector<2x256xf32>
    %c2 = arith.constant 2 : index
    %50 = memref.load %arg1[%c2] : memref<18xf32, #tpu.memory_space<smem>>
    %51 = vector.broadcast %50 : f32 to vector<2x256xf32>
    %52 = arith.mulf %51, %8 : vector<2x256xf32>
    %c11 = arith.constant 11 : index
    %53 = memref.load %arg1[%c11] : memref<18xf32, #tpu.memory_space<smem>>
    %54 = vector.broadcast %53 : f32 to vector<2x256xf32>
    %55 = arith.mulf %54, %11 : vector<2x256xf32>
    %56 = arith.addf %52, %55 : vector<2x256xf32>
    %c15_i32_10 = arith.constant 15 : i32
    %57 = tpu.dynamic_rotate %56 by %c15_i32_10 dim 1 : vector<2x256xf32>, i32 -> vector<2x256xf32>
    %c16_i32_11 = arith.constant 16 : i32
    %58 = vector.broadcast %c16_i32_11 : i32 to vector<1x256xi32>
    %59 = arith.cmpi sge, %12, %58 : vector<1x256xi32>
    %c14_i32 = arith.constant 14 : i32
    %60 = vector.broadcast %c14_i32 : i32 to vector<1x256xi32>
    %61 = arith.cmpi sle, %14, %60 : vector<1x256xi32>
    %62 = arith.andi %59, %61 : vector<1x256xi1>
    %cst_12 = arith.constant 0.000000e+00 : f32
    %63 = vector.shape_cast %62 : vector<1x256xi1> to vector<1x256xi1>
    %64 = vector.broadcast %63 : vector<1x256xi1> to vector<2x256xi1>
    %65 = vector.broadcast %cst_12 : f32 to vector<2x256xf32>
    %66 = arith.select %64, %57, %65 : vector<2x256xi1>, vector<2x256xf32>
    %67 = arith.addf %49, %66 : vector<2x256xf32>
    %c3 = arith.constant 3 : index
    %68 = memref.load %arg1[%c3] : memref<18xf32, #tpu.memory_space<smem>>
    %69 = vector.broadcast %68 : f32 to vector<2x256xf32>
    %70 = arith.mulf %69, %8 : vector<2x256xf32>
    %c12 = arith.constant 12 : index
    %71 = memref.load %arg1[%c12] : memref<18xf32, #tpu.memory_space<smem>>
    %72 = vector.broadcast %71 : f32 to vector<2x256xf32>
    %73 = arith.mulf %72, %11 : vector<2x256xf32>
    %74 = arith.addf %70, %73 : vector<2x256xf32>
    %c1_i32_13 = arith.constant 1 : i32
    %75 = tpu.dynamic_rotate %74 by %c1_i32_13 dim 1 : vector<2x256xf32>, i32 -> vector<2x256xf32>
    %c1_i32_14 = arith.constant 1 : i32
    %76 = vector.broadcast %c1_i32_14 : i32 to vector<1x256xi32>
    %77 = arith.cmpi sge, %14, %76 : vector<1x256xi32>
    %cst_15 = arith.constant 0.000000e+00 : f32
    %78 = vector.shape_cast %77 : vector<1x256xi1> to vector<1x256xi1>
    %79 = vector.broadcast %78 : vector<1x256xi1> to vector<2x256xi1>
    %80 = vector.broadcast %cst_15 : f32 to vector<2x256xf32>
    %81 = arith.select %79, %75, %80 : vector<2x256xi1>, vector<2x256xf32>
    %82 = arith.addf %67, %81 : vector<2x256xf32>
    %c4 = arith.constant 4 : index
    %83 = memref.load %arg1[%c4] : memref<18xf32, #tpu.memory_space<smem>>
    %84 = vector.broadcast %83 : f32 to vector<2x256xf32>
    %85 = arith.mulf %84, %8 : vector<2x256xf32>
    %c13 = arith.constant 13 : index
    %86 = memref.load %arg1[%c13] : memref<18xf32, #tpu.memory_space<smem>>
    %87 = vector.broadcast %86 : f32 to vector<2x256xf32>
    %88 = arith.mulf %87, %11 : vector<2x256xf32>
    %89 = arith.addf %85, %88 : vector<2x256xf32>
    %90 = arith.addf %82, %89 : vector<2x256xf32>
    %c5 = arith.constant 5 : index
    %91 = memref.load %arg1[%c5] : memref<18xf32, #tpu.memory_space<smem>>
    %92 = vector.broadcast %91 : f32 to vector<2x256xf32>
    %93 = arith.mulf %92, %8 : vector<2x256xf32>
    %c14 = arith.constant 14 : index
    %94 = memref.load %arg1[%c14] : memref<18xf32, #tpu.memory_space<smem>>
    %95 = vector.broadcast %94 : f32 to vector<2x256xf32>
    %96 = arith.mulf %95, %11 : vector<2x256xf32>
    %97 = arith.addf %93, %96 : vector<2x256xf32>
    %c255_i32 = arith.constant 255 : i32
    %98 = tpu.dynamic_rotate %97 by %c255_i32 dim 1 : vector<2x256xf32>, i32 -> vector<2x256xf32>
    %c14_i32_16 = arith.constant 14 : i32
    %99 = vector.broadcast %c14_i32_16 : i32 to vector<1x256xi32>
    %100 = arith.cmpi sle, %14, %99 : vector<1x256xi32>
    %cst_17 = arith.constant 0.000000e+00 : f32
    %101 = vector.shape_cast %100 : vector<1x256xi1> to vector<1x256xi1>
    %102 = vector.broadcast %101 : vector<1x256xi1> to vector<2x256xi1>
    %103 = vector.broadcast %cst_17 : f32 to vector<2x256xf32>
    %104 = arith.select %102, %98, %103 : vector<2x256xi1>, vector<2x256xf32>
    %105 = arith.addf %90, %104 : vector<2x256xf32>
    %c6 = arith.constant 6 : index
    %106 = memref.load %arg1[%c6] : memref<18xf32, #tpu.memory_space<smem>>
    %107 = vector.broadcast %106 : f32 to vector<2x256xf32>
    %108 = arith.mulf %107, %8 : vector<2x256xf32>
    %c15 = arith.constant 15 : index
    %109 = memref.load %arg1[%c15] : memref<18xf32, #tpu.memory_space<smem>>
    %110 = vector.broadcast %109 : f32 to vector<2x256xf32>
    %111 = arith.mulf %110, %11 : vector<2x256xf32>
    %112 = arith.addf %108, %111 : vector<2x256xf32>
    %c241_i32 = arith.constant 241 : i32
    %113 = tpu.dynamic_rotate %112 by %c241_i32 dim 1 : vector<2x256xf32>, i32 -> vector<2x256xf32>
    %c240_i32 = arith.constant 240 : i32
    %114 = vector.broadcast %c240_i32 : i32 to vector<1x256xi32>
    %115 = arith.cmpi slt, %12, %114 : vector<1x256xi32>
    %c1_i32_18 = arith.constant 1 : i32
    %116 = vector.broadcast %c1_i32_18 : i32 to vector<1x256xi32>
    %117 = arith.cmpi sge, %14, %116 : vector<1x256xi32>
    %118 = arith.andi %115, %117 : vector<1x256xi1>
    %cst_19 = arith.constant 0.000000e+00 : f32
    %119 = vector.shape_cast %118 : vector<1x256xi1> to vector<1x256xi1>
    %120 = vector.broadcast %119 : vector<1x256xi1> to vector<2x256xi1>
    %121 = vector.broadcast %cst_19 : f32 to vector<2x256xf32>
    %122 = arith.select %120, %113, %121 : vector<2x256xi1>, vector<2x256xf32>
    %123 = arith.addf %105, %122 : vector<2x256xf32>
    %c7 = arith.constant 7 : index
    %124 = memref.load %arg1[%c7] : memref<18xf32, #tpu.memory_space<smem>>
    %125 = vector.broadcast %124 : f32 to vector<2x256xf32>
    %126 = arith.mulf %125, %8 : vector<2x256xf32>
    %c16 = arith.constant 16 : index
    %127 = memref.load %arg1[%c16] : memref<18xf32, #tpu.memory_space<smem>>
    %128 = vector.broadcast %127 : f32 to vector<2x256xf32>
    %129 = arith.mulf %128, %11 : vector<2x256xf32>
    %130 = arith.addf %126, %129 : vector<2x256xf32>
    %c240_i32_20 = arith.constant 240 : i32
    %131 = tpu.dynamic_rotate %130 by %c240_i32_20 dim 1 : vector<2x256xf32>, i32 -> vector<2x256xf32>
    %c240_i32_21 = arith.constant 240 : i32
    %132 = vector.broadcast %c240_i32_21 : i32 to vector<1x256xi32>
    %133 = arith.cmpi slt, %12, %132 : vector<1x256xi32>
    %cst_22 = arith.constant 0.000000e+00 : f32
    %134 = vector.shape_cast %133 : vector<1x256xi1> to vector<1x256xi1>
    %135 = vector.broadcast %134 : vector<1x256xi1> to vector<2x256xi1>
    %136 = vector.broadcast %cst_22 : f32 to vector<2x256xf32>
    %137 = arith.select %135, %131, %136 : vector<2x256xi1>, vector<2x256xf32>
    %138 = arith.addf %123, %137 : vector<2x256xf32>
    %c8 = arith.constant 8 : index
    %139 = memref.load %arg1[%c8] : memref<18xf32, #tpu.memory_space<smem>>
    %140 = vector.broadcast %139 : f32 to vector<2x256xf32>
    %141 = arith.mulf %140, %8 : vector<2x256xf32>
    %c17 = arith.constant 17 : index
    %142 = memref.load %arg1[%c17] : memref<18xf32, #tpu.memory_space<smem>>
    %143 = vector.broadcast %142 : f32 to vector<2x256xf32>
    %144 = arith.mulf %143, %11 : vector<2x256xf32>
    %145 = arith.addf %141, %144 : vector<2x256xf32>
    %c239_i32 = arith.constant 239 : i32
    %146 = tpu.dynamic_rotate %145 by %c239_i32 dim 1 : vector<2x256xf32>, i32 -> vector<2x256xf32>
    %c240_i32_23 = arith.constant 240 : i32
    %147 = vector.broadcast %c240_i32_23 : i32 to vector<1x256xi32>
    %148 = arith.cmpi slt, %12, %147 : vector<1x256xi32>
    %c14_i32_24 = arith.constant 14 : i32
    %149 = vector.broadcast %c14_i32_24 : i32 to vector<1x256xi32>
    %150 = arith.cmpi sle, %14, %149 : vector<1x256xi32>
    %151 = arith.andi %148, %150 : vector<1x256xi1>
    %cst_25 = arith.constant 0.000000e+00 : f32
    %152 = vector.shape_cast %151 : vector<1x256xi1> to vector<1x256xi1>
    %153 = vector.broadcast %152 : vector<1x256xi1> to vector<2x256xi1>
    %154 = vector.broadcast %cst_25 : f32 to vector<2x256xf32>
    %155 = arith.select %153, %146, %154 : vector<2x256xi1>, vector<2x256xf32>
    %156 = arith.addf %138, %155 : vector<2x256xf32>
    %cst_26 = arith.constant 0.000000e+00 : f32
    %157 = vector.broadcast %cst_26 : f32 to vector<2x256xf32>
    %158 = arith.subf %157, %156 : vector<2x256xf32>
    %159 = math.exp %158 : vector<2x256xf32>
    %cst_27 = arith.constant 1.000000e+00 : f32
    %160 = vector.broadcast %cst_27 : f32 to vector<2x256xf32>
    %161 = arith.addf %160, %159 : vector<2x256xf32>
    %162 = tpu.reciprocal %161 : vector<2x256xf32> -> vector<2x256xf32>
    %c0_28 = arith.constant 0 : index
    %c0_29 = arith.constant 0 : index
    %163 = vector.load %arg3[%c0_28, %c0_29] : memref<2x1024xf32, #tpu.memory_space<vmem>>, vector<2x256xf32>
    %164 = arith.mulf %163, %162 : vector<2x256xf32>
    %c0_30 = arith.constant 0 : index
    %c0_31 = arith.constant 0 : index
    %165 = vector.load %arg4[%c0_30, %c0_31] : memref<2x1024xf32, #tpu.memory_space<vmem>>, vector<2x256xf32>
    tpu.vector_store %arg4[%c0_30, %c0_31], %164 {strides = array<i32>} : memref<2x1024xf32, #tpu.memory_space<vmem>>, vector<2x256xf32>,
    %c0_32 = arith.constant 0 : index
    %c256_33 = arith.constant 256 : index
    %166 = vector.load %arg3[%c0_32, %c256_33] : memref<2x1024xf32, #tpu.memory_space<vmem>>, vector<2x256xf32>
    %167 = arith.mulf %166, %162 : vector<2x256xf32>
    %c0_34 = arith.constant 0 : index
    %c256_35 = arith.constant 256 : index
    %168 = vector.load %arg4[%c0_34, %c256_35] : memref<2x1024xf32, #tpu.memory_space<vmem>>, vector<2x256xf32>
    tpu.vector_store %arg4[%c0_34, %c256_35], %167 {strides = array<i32>} : memref<2x1024xf32, #tpu.memory_space<vmem>>, vector<2x256xf32>,
    %c0_36 = arith.constant 0 : index
    %c512_37 = arith.constant 512 : index
    %169 = vector.load %arg3[%c0_36, %c512_37] : memref<2x1024xf32, #tpu.memory_space<vmem>>, vector<2x256xf32>
    %170 = arith.mulf %169, %162 : vector<2x256xf32>
    %c0_38 = arith.constant 0 : index
    %c512_39 = arith.constant 512 : index
    %171 = vector.load %arg4[%c0_38, %c512_39] : memref<2x1024xf32, #tpu.memory_space<vmem>>, vector<2x256xf32>
    tpu.vector_store %arg4[%c0_38, %c512_39], %170 {strides = array<i32>} : memref<2x1024xf32, #tpu.memory_space<vmem>>, vector<2x256xf32>,
    %c0_40 = arith.constant 0 : index
    %c768_41 = arith.constant 768 : index
    %172 = vector.load %arg3[%c0_40, %c768_41] : memref<2x1024xf32, #tpu.memory_space<vmem>>, vector<2x256xf32>
    %173 = arith.mulf %172, %162 : vector<2x256xf32>
    %c0_42 = arith.constant 0 : index
    %c768_43 = arith.constant 768 : index
    %174 = vector.load %arg4[%c0_42, %c768_43] : memref<2x1024xf32, #tpu.memory_space<vmem>>, vector<2x256xf32>
    tpu.vector_store %arg4[%c0_42, %c768_43], %173 {strides = array<i32>} : memref<2x1024xf32, #tpu.memory_space<vmem>>, vector<2x256xf32>,
    return
  }
  func.func @transform_0(%arg0: i32) -> i32 {
    %c0_i32 = arith.constant 0 : i32
    %c0_i32_0 = arith.constant 0 : i32
    return %c0_i32 : i32
  }
  func.func @transform_1(%arg0: i32) -> i32 {
    %c0_i32 = arith.constant 0 : i32
    %c0_i32_0 = arith.constant 0 : i32
    return %c0_i32 : i32
  }
  func.func @transform_2(%arg0: i32) -> (i32, i32) {
    %c0_i32 = arith.constant 0 : i32
    %c0_i32_0 = arith.constant 0 : i32
    return %arg0, %c0_i32 : i32, i32
  }
  func.func @transform_3(%arg0: i32) -> (i32, i32) {
    %c0_i32 = arith.constant 0 : i32
    %c0_i32_0 = arith.constant 0 : i32
    return %arg0, %c0_i32 : i32, i32
  }
}

</mosaic_0001>

<llo_original>
// kernel: tpu_custom_call.1
$region0: #{tpu_custom_call.1}
  #allocation0 [shape = 'u32[]', space=smem, size = 0x4, offset = 0x4, fixed_abs, tag = 'smem constant byte address 0x4 - core index']
  #allocation1 [shape = 'u32[144,128]{1,0:T(1,128)}', space=vmem, size = 0x12000, scoped, tag = 'internal scratch']
  #allocation2 [shape = 'f32[1]{0:T(128)S(6)}', space=smem, size = 0x200, scoped, tag = 'scoped memory for tpu_custom_call.1']
  %s0 = inlined_call_operand.vmem [shape: f32[18], index: 0, kind: input, shape index: {}]
  %s1 = inlined_call_operand.<no memory space> [shape: f32[1], index: 1, kind: input, shape index: {}]
  %s2 = inlined_call_operand.hbm [shape: f32[2,1024], index: 2, kind: input, shape index: {}]
  %s3 = inlined_call_operand.hbm [shape: f32[2,1024], index: 3, kind: output, shape index: {}]
  %s4 = sld [smem:[#allocation0]]
  $region30: #{tpu_custom_call.1} parent=0
    _
  %s6 = ssub.s32 1, %s4
  %s7 = scalar_select 0, %s6, %s4
  %8 = sst [smem:[#allocation2]] %s1
  $region1: #{tpu_custom_call.1} parent=0
    #allocation3 [shape = 'u8[512]{0}', space=smem, size = 0x200, scoped, tag = 'input window, operand 0, single buffered']
    #allocation4 [shape = 's32[1]{0}', space=sflag, size = 0x4, scoped, tag = 'scoped memory for tpu_custom_call.1']
    #allocation5 [shape = 's32[1]{0}', space=sflag, size = 0x4, scoped, tag = 'scoped memory for tpu_custom_call.1']
    #allocation6 [shape = 's32[1]{0}', space=sflag, size = 0x4, scoped, tag = 'scoped memory for tpu_custom_call.1']
    #allocation7 [shape = 'u8[8192]{0}', space=vmem, size = 0x2000, scoped, tag = 'input window, operand 2, single buffered']
    #allocation8 [shape = 'u8[8192]{0}', space=vmem, size = 0x2000, scoped, tag = 'output window, operand 0, single buffered']
    %9 = vsyncpa [#allocation6], 0
    %10 = vsyncpa [#allocation4], 0
    %11 = vsyncpa [#allocation5], 0
    // Predicated region
    $region2: #{tpu_custom_call.1} parent=1 // pred_check
      _
    $region3: #{tpu_custom_call.1} parent=1 // pred_check_branch
      %13 = sbr.rel (0) target = $region5
    $region4: #{tpu_custom_call.1} parent=1 // pred_region
      %s15 = ssub.s32 16, 16
      %16 = vsyncadd [#allocation6], %s15
      %s18 = sshll.u32 %s0, 4
      %s19 = int_to_ptr.vmem [resolvable:$true] %s18
      %21 = dma.vmem_to_smem %s19, 16, [#allocation3], [#allocation6]
    $region5: #{tpu_custom_call.1} parent=1 // pred_fallthru
      _
    // Predicated region
    $region6: #{tpu_custom_call.1} parent=1 // pred_check
      _
    $region7: #{tpu_custom_call.1} parent=1 // pred_check_branch
      %23 = sbr.rel (0) target = $region9
    $region8: #{tpu_custom_call.1} parent=1 // pred_region
      _
    $region9: #{tpu_custom_call.1} parent=1 // pred_fallthru
      _
    // Predicated region
    $region10: #{tpu_custom_call.1} parent=1 // pred_check
      _
    $region11: #{tpu_custom_call.1} parent=1 // pred_check_branch
      %25 = sbr.rel (0) target = $region13
    $region12: #{tpu_custom_call.1} parent=1 // pred_region
      %s27 = ssub.s32 256, 256
      %28 = vsyncadd [#allocation4], %s27
      %s30 = sshll.u32 [#allocation7], 4
      %s31 = int_to_ptr.vmem [resolvable:$true] %s30
      %33 = dma.hbm_to_vmem [thread:$0]  %s2, 256, %s31, [#allocation4]
    $region13: #{tpu_custom_call.1} parent=1 // pred_fallthru
      _
    // Predicated region
    $region14: #{tpu_custom_call.1} parent=1 // pred_check
      _
    $region15: #{tpu_custom_call.1} parent=1 // pred_check_branch
      %35 = sbr.rel (0) target = $region17
    $region16: #{tpu_custom_call.1} parent=1 // pred_region
      %36 = dma.done [#allocation6], 16
    $region17: #{tpu_custom_call.1} parent=1 // pred_fallthru
      _
    // Predicated region
    $region18: #{tpu_custom_call.1} parent=1 // pred_check
      _
    $region19: #{tpu_custom_call.1} parent=1 // pred_check_branch
      %38 = sbr.rel (0) target = $region21
    $region20: #{tpu_custom_call.1} parent=1 // pred_region
      %39 = dma.done [#allocation4], 256
    $region21: #{tpu_custom_call.1} parent=1 // pred_fallthru
      _
    %40 = sfence
    %v41 = vld [vmem:[#allocation7] sm:$0xf]
    %v42 = vld [vmem:[#allocation7 + $0x4] sm:$0xf]
    %v43 = vmax.f32 %v41, %v42
    %v44 = vadd.f32 %v41, %v42
    %v45 = vld [vmem:[#allocation7 + $0x8] sm:$0xf]
    %v46 = vmax.f32 %v43, %v45
    %v47 = vadd.f32 %v44, %v45
    %v48 = vld [vmem:[#allocation7 + $0xc] sm:$0xf]
    %v49 = vmax.f32 %v46, %v48
    %v50 = vadd.f32 %v47, %v48
    %v51 = vmul.f32 %v50, 0.25
    %v52 = vlaneseq
    %v53 = vand.u32 %v52, 127
    %v54 = vadd.s32 %v53, 128
    %v55 = vand.u32 %v53, 15
    %v56 = vand.u32 %v54, 15
    %s57 = sld [smem:[#allocation2]]
    %v58 = vstv %s57
    %s59 = sld [smem:[#allocation3]]
    %v60 = vstv %s59
    %v61 = vmul.f32 %v60, %v49
    %s62 = sld [smem:[#allocation3 + $0x9]]
    %v63 = vstv %s62
    %v64 = vmul.f32 %v63, %v51
    %v65 = vadd.f32 %v61, %v64
    %v68 = vunpack.c.l.s4 1983009808
    %v69 = vunpack.c.0.s8 %v68
    %v70 = vlaneseq
    %v71 = vshrl.u32 %v70, 7
    %v72 = vsub.s32 %v69, %v71
    %v73 = vrot.slane %v65, %v72
    %v74 = vcombine.high %v73, %v73
    %77 = vrot.lane.b32.xlu0 %v73, 17
    %v78 = vpop.permute.xlu0 %77
    %79 = vrot.lane.b32.xlu0 %v74, 17
    %v80 = vpop.permute.xlu0 %79
    %vm81 = vcmp.lt.s32.totalorder %v53, 17
    %v82 = vsel %vm81, %v78, %v80
    %v83 = vsel %vm81, %v80, %v78
    %vm84 = vcmp.ge.s32.totalorder %v53, 16
    %vm85 = vcmp.ge.s32.totalorder %v54, 16
    %vm86 = vcmp.ge.s32.totalorder %v55, 1
    %vm87 = vcmp.ge.s32.totalorder %v56, 1
    %vm88 = vmand %vm84, %vm86
    %vm89 = vmand %vm85, %vm87
    %v90 = vsel %vm88, 1, 0
    %v91 = vsel %vm89, 1, 0
    %vm92 = vcmp.eq.s32.totalorder %v90, 1
    %vm93 = vcmp.eq.s32.totalorder %v91, 1
    %v94 = vsel %vm92, %v83, 0.0
    %v95 = vsel %vm93, %v82, 0.0
    %v96 = vadd.f32 %v58, %v94
    %v97 = vadd.f32 %v58, %v95
    %s98 = sld [smem:[#allocation3 + $0x1]]
    %v99 = vstv %s98
    %v100 = vmul.f32 %v99, %v49
    %s101 = sld [smem:[#allocation3 + $0xa]]
    %v102 = vstv %s101
    %v103 = vmul.f32 %v102, %v51
    %v104 = vadd.f32 %v100, %v103
    %v107 = vunpack.c.l.s4 1983009808
    %v108 = vunpack.c.0.s8 %v107
    %v109 = vlaneseq
    %v110 = vshrl.u32 %v109, 7
    %v111 = vsub.s32 %v108, %v110
    %v112 = vrot.slane %v104, %v111
    %v113 = vcombine.high %v112, %v112
    %116 = vrot.lane.b32.xlu0 %v112, 16
    %v117 = vpop.permute.xlu0 %116
    %118 = vrot.lane.b32.xlu0 %v113, 16
    %v119 = vpop.permute.xlu0 %118
    %vm120 = vcmp.lt.s32.totalorder %v53, 16
    %v121 = vsel %vm120, %v117, %v119
    %v122 = vsel %vm120, %v119, %v117
    %v123 = vsel %vm84, 1, 0
    %v124 = vsel %vm85, 1, 0
    %vm125 = vcmp.eq.s32.totalorder %v123, 1
    %vm126 = vcmp.eq.s32.totalorder %v124, 1
    %v127 = vsel %vm125, %v122, 0.0
    %v128 = vsel %vm126, %v121, 0.0
    %v129 = vadd.f32 %v96, %v127
    %v130 = vadd.f32 %v97, %v128
    %s131 = sld [smem:[#allocation3 + $0x2]]
    %v132 = vstv %s131
    %v133 = vmul.f32 %v132, %v49
    %s134 = sld [smem:[#allocation3 + $0xb]]
    %v135 = vstv %s134
    %v136 = vmul.f32 %v135, %v51
    %v137 = vadd.f32 %v133, %v136
    %v140 = vunpack.c.l.s4 1983009808
    %v141 = vunpack.c.0.s8 %v140
    %v142 = vlaneseq
    %v143 = vshrl.u32 %v142, 7
    %v144 = vsub.s32 %v141, %v143
    %v145 = vrot.slane %v137, %v144
    %v146 = vcombine.high %v145, %v145
    %149 = vrot.lane.b32.xlu0 %v145, 15
    %v150 = vpop.permute.xlu0 %149
    %151 = vrot.lane.b32.xlu0 %v146, 15
    %v152 = vpop.permute.xlu0 %151
    %vm153 = vcmp.lt.s32.totalorder %v53, 15
    %v154 = vsel %vm153, %v150, %v152
    %v155 = vsel %vm153, %v152, %v150
    %vm156 = vcmp.le.s32.totalorder %v55, 14
    %vm157 = vcmp.le.s32.totalorder %v56, 14
    %vm158 = vmand %vm84, %vm156
    %vm159 = vmand %vm85, %vm157
    %v160 = vsel %vm158, 1, 0
    %v161 = vsel %vm159, 1, 0
    %vm162 = vcmp.eq.s32.totalorder %v160, 1
    %vm163 = vcmp.eq.s32.totalorder %v161, 1
    %v164 = vsel %vm162, %v155, 0.0
    %v165 = vsel %vm163, %v154, 0.0
    %v166 = vadd.f32 %v129, %v164
    %v167 = vadd.f32 %v130, %v165
    %s168 = sld [smem:[#allocation3 + $0x3]]
    %v169 = vstv %s168
    %v170 = vmul.f32 %v169, %v49
    %s171 = sld [smem:[#allocation3 + $0xc]]
    %v172 = vstv %s171
    %v173 = vmul.f32 %v172, %v51
    %v174 = vadd.f32 %v170, %v173
    %v177 = vunpack.c.l.s4 1983009808
    %v178 = vunpack.c.0.s8 %v177
    %v179 = vlaneseq
    %v180 = vshrl.u32 %v179, 7
    %v181 = vsub.s32 %v178, %v180
    %v182 = vrot.slane %v174, %v181
    %v183 = vcombine.high %v182, %v182
    %186 = vrot.lane.b32.xlu0 %v182, 1
    %v187 = vpop.permute.xlu0 %186
    %188 = vrot.lane.b32.xlu0 %v183, 1
    %v189 = vpop.permute.xlu0 %188
    %vm190 = vcmp.lt.s32.totalorder %v53, 1
    %v191 = vsel %vm190, %v187, %v189
    %v192 = vsel %vm190, %v189, %v187
    %v193 = vsel %vm86, 1, 0
    %v194 = vsel %vm87, 1, 0
    %vm195 = vcmp.eq.s32.totalorder %v193, 1
    %vm196 = vcmp.eq.s32.totalorder %v194, 1
    %v197 = vsel %vm195, %v192, 0.0
    %v198 = vsel %vm196, %v191, 0.0
    %v199 = vadd.f32 %v166, %v197
    %v200 = vadd.f32 %v167, %v198
    %s201 = sld [smem:[#allocation3 + $0x4]]
    %v202 = vstv %s201
    %v203 = vmul.f32 %v202, %v49
    %s204 = sld [smem:[#allocation3 + $0xd]]
    %v205 = vstv %s204
    %v206 = vmul.f32 %v205, %v51
    %v207 = vadd.f32 %v203, %v206
    %v210 = vunpack.c.l.s4 1983009808
    %v211 = vunpack.c.0.s8 %v210
    %v212 = vlaneseq
    %v213 = vshrl.u32 %v212, 7
    %v214 = vsub.s32 %v211, %v213
    %v215 = vrot.slane %v207, %v214
    %v216 = vcombine.high %v215, %v215
    %v219 = vadd.f32 %v199, %v215
    %v220 = vadd.f32 %v200, %v216
    %s221 = sld [smem:[#allocation3 + $0x5]]
    %v222 = vstv %s221
    %v223 = vmul.f32 %v222, %v49
    %s224 = sld [smem:[#allocation3 + $0xe]]
    %v225 = vstv %s224
    %v226 = vmul.f32 %v225, %v51
    %v227 = vadd.f32 %v223, %v226
    %v230 = vunpack.c.l.s4 1983009808
    %v231 = vunpack.c.0.s8 %v230
    %v232 = vlaneseq
    %v233 = vshrl.u32 %v232, 7
    %v234 = vsub.s32 %v231, %v233
    %v235 = vrot.slane %v227, %v234
    %v236 = vcombine.high %v235, %v235
    %239 = vrot.lane.b32.xlu0 %v235, 127
    %v240 = vpop.permute.xlu0 %239
    %241 = vrot.lane.b32.xlu0 %v236, 127
    %v242 = vpop.permute.xlu0 %241
    %vm243 = vcmp.lt.s32.totalorder %v53, 127
    %v244 = vsel %vm243, %v240, %v242
    %v245 = vsel %vm243, %v242, %v240
    %v246 = vsel %vm156, 1, 0
    %v247 = vsel %vm157, 1, 0
    %vm248 = vcmp.eq.s32.totalorder %v246, 1
    %vm249 = vcmp.eq.s32.totalorder %v247, 1
    %v250 = vsel %vm248, %v244, 0.0
    %v251 = vsel %vm249, %v245, 0.0
    %v252 = vadd.f32 %v219, %v250
    %v253 = vadd.f32 %v220, %v251
    %s254 = sld [smem:[#allocation3 + $0x6]]
    %v255 = vstv %s254
    %v256 = vmul.f32 %v255, %v49
    %s257 = sld [smem:[#allocation3 + $0xf]]
    %v258 = vstv %s257
    %v259 = vmul.f32 %v258, %v51
    %v260 = vadd.f32 %v256, %v259
    %v263 = vunpack.c.l.s4 1983009808
    %v264 = vunpack.c.0.s8 %v263
    %v265 = vlaneseq
    %v266 = vshrl.u32 %v265, 7
    %v267 = vsub.s32 %v264, %v266
    %v268 = vrot.slane %v260, %v267
    %v269 = vcombine.high %v268, %v268
    %272 = vrot.lane.b32.xlu0 %v268, 113
    %v273 = vpop.permute.xlu0 %272
    %274 = vrot.lane.b32.xlu0 %v269, 113
    %v275 = vpop.permute.xlu0 %274
    %vm276 = vcmp.lt.s32.totalorder %v53, 113
    %v277 = vsel %vm276, %v273, %v275
    %v278 = vsel %vm276, %v275, %v273
    %vm279 = vcmp.lt.s32.totalorder %v53, 240
    %vm280 = vcmp.lt.s32.totalorder %v54, 240
    %vm281 = vmand %vm279, %vm86
    %vm282 = vmand %vm280, %vm87
    %v283 = vsel %vm281, 1, 0
    %v284 = vsel %vm282, 1, 0
    %vm285 = vcmp.eq.s32.totalorder %v283, 1
    %vm286 = vcmp.eq.s32.totalorder %v284, 1
    %v287 = vsel %vm285, %v277, 0.0
    %v288 = vsel %vm286, %v278, 0.0
    %v289 = vadd.f32 %v252, %v287
    %v290 = vadd.f32 %v253, %v288
    %s291 = sld [smem:[#allocation3 + $0x7]]
    %v292 = vstv %s291
    %v293 = vmul.f32 %v292, %v49
    %s294 = sld [smem:[#allocation3 + $0x10]]
    %v295 = vstv %s294
    %v296 = vmul.f32 %v295, %v51
    %v297 = vadd.f32 %v293, %v296
    %v300 = vunpack.c.l.s4 1983009808
    %v301 = vunpack.c.0.s8 %v300
    %v302 = vlaneseq
    %v303 = vshrl.u32 %v302, 7
    %v304 = vsub.s32 %v301, %v303
    %v305 = vrot.slane %v297, %v304
    %v306 = vcombine.high %v305, %v305
    %309 = vrot.lane.b32.xlu0 %v305, 112
    %v310 = vpop.permute.xlu0 %309
    %311 = vrot.lane.b32.xlu0 %v306, 112
    %v312 = vpop.permute.xlu0 %311
    %vm313 = vcmp.lt.s32.totalorder %v53, 112
    %v314 = vsel %vm313, %v310, %v312
    %v315 = vsel %vm313, %v312, %v310
    %v316 = vsel %vm279, 1, 0
    %v317 = vsel %vm280, 1, 0
    %vm318 = vcmp.eq.s32.totalorder %v316, 1
    %vm319 = vcmp.eq.s32.totalorder %v317, 1
    %v320 = vsel %vm318, %v314, 0.0
    %v321 = vsel %vm319, %v315, 0.0
    %v322 = vadd.f32 %v289, %v320
    %v323 = vadd.f32 %v290, %v321
    %s324 = sld [smem:[#allocation3 + $0x8]]
    %v325 = vstv %s324
    %v326 = vmul.f32 %v325, %v49
    %s327 = sld [smem:[#allocation3 + $0x11]]
    %v328 = vstv %s327
    %v329 = vmul.f32 %v328, %v51
    %v330 = vadd.f32 %v326, %v329
    %v333 = vunpack.c.l.s4 1983009808
    %v334 = vunpack.c.0.s8 %v333
    %v335 = vlaneseq
    %v336 = vshrl.u32 %v335, 7
    %v337 = vsub.s32 %v334, %v336
    %v338 = vrot.slane %v330, %v337
    %v339 = vcombine.high %v338, %v338
    %342 = vrot.lane.b32.xlu0 %v338, 111
    %v343 = vpop.permute.xlu0 %342
    %344 = vrot.lane.b32.xlu0 %v339, 111
    %v345 = vpop.permute.xlu0 %344
    %vm346 = vcmp.lt.s32.totalorder %v53, 111
    %v347 = vsel %vm346, %v343, %v345
    %v348 = vsel %vm346, %v345, %v343
    %vm349 = vmand %vm279, %vm156
    %vm350 = vmand %vm280, %vm157
    %v351 = vsel %vm349, 1, 0
    %v352 = vsel %vm350, 1, 0
    %vm353 = vcmp.eq.s32.totalorder %v351, 1
    %vm354 = vcmp.eq.s32.totalorder %v352, 1
    %v355 = vsel %vm353, %v347, 0.0
    %v356 = vsel %vm354, %v348, 0.0
    %v357 = vadd.f32 %v322, %v355
    %v358 = vadd.f32 %v323, %v356
    %v359 = vsub.f32 0.0, %v357
    %v360 = vsub.f32 0.0, %v358
    %v361 = vmul.f32 %v359, 1.442695
    %v362 = vpow.pop %v361
    %v363 = vmul.f32 %v360, 1.442695
    %v364 = vpow.pop %v363
    %v365 = vadd.f32 %v362, 1.0
    %v366 = vadd.f32 %v364, 1.0
    %v367 = vrcp.pop %v365
    %v368 = vrcp.pop %v366
    %v371 = vcombine.low %v367, %v368
    %v373 = vunpack.c.l.s4 1983009808
    %v374 = vunpack.c.0.s8 %v373
    %v375 = vlaneseq
    %v376 = vshrl.u32 %v375, 7
    %v377 = vsub.s32 %v374, %v376
    %v378 = vrot.slane %v371, %v377
    %v380 = vmul.f32 %v41, %v378
    %381 = vst [vmem:[#allocation8] sm:$0xf] %v380
    %v382 = vld [vmem:[#allocation7 + $0x4] sm:$0xf]
    %v383 = vmul.f32 %v382, %v378
    %384 = vst [vmem:[#allocation8 + $0x4] sm:$0xf] %v383
    %v385 = vld [vmem:[#allocation7 + $0x8] sm:$0xf]
    %v386 = vmul.f32 %v385, %v378
    %387 = vst [vmem:[#allocation8 + $0x8] sm:$0xf] %v386
    %v388 = vld [vmem:[#allocation7 + $0xc] sm:$0xf]
    %v389 = vmul.f32 %v388, %v378
    %390 = vst [vmem:[#allocation8 + $0xc] sm:$0xf] %v389
    // Predicated region
    $region22: #{tpu_custom_call.1} parent=1 // pred_check
      _
    $region23: #{tpu_custom_call.1} parent=1 // pred_check_branch
      %392 = sbr.rel (0) target = $region25
    $region24: #{tpu_custom_call.1} parent=1 // pred_region
      %s394 = ssub.s32 256, 256
      %395 = vsyncadd [#allocation5], %s394
      %s397 = sshll.u32 [#allocation8], 4
      %s398 = int_to_ptr.vmem [resolvable:$true] %s397
      %400 = dma.vmem_to_hbm [thread:$0]  %s398, 256, %s3, [#allocation5]
    $region25: #{tpu_custom_call.1} parent=1 // pred_fallthru
      _
    // Predicated region
    $region26: #{tpu_custom_call.1} parent=1 // pred_check
      _
    $region27: #{tpu_custom_call.1} parent=1 // pred_check_branch
      %402 = sbr.rel (0) target = $region29
    $region28: #{tpu_custom_call.1} parent=1 // pred_region
      %403 = dma.done [#allocation5], 256
    $region29: #{tpu_custom_call.1} parent=1 // pred_fallthru
      _
    %404 = vsyncpa [#allocation4], 1
    %405 = vsyncpa [#allocation5], 1
    %406 = vsyncpa [#allocation6], 1

</llo_original>
